<compile_context>
chip_gen: v5e
topology: v5e:2x2
jax: 0.10.0
libtpu: 0.0.40
codegen_flags: <defaults>
</compile_context>

<pallas_src>
import jax
import jax.numpy as jnp
from jax.experimental import pallas as pl
from jax.experimental.pallas import tpu as pltpu


# ---------------------------------------------------------------------------
# Fused kernel: feature transform + block-diagonal aggregation +
# BatchNorm1d (training-mode batch stats, folded affine) + LeakyReLU.
# ---------------------------------------------------------------------------
def fused_gcn_bn_act_kernel(x_ref, a_ref, w_ref, gamma_ref, beta_ref, o_ref):
    # x_ref: (BN, S) f32   a_ref: (BN, BN) f32   w_ref: (S, D) f32
    # gamma_ref / beta_ref: (1, D) f32            o_ref: (B, N, D) f32
    B, N, D = o_ref.shape
    BN = B * N

    # (1) Feature transform: one sublane-dense MXU matmul, bf16 operands
    #     (cast in vregs, no wrapper-cast HBM round trip), f32 accumulate.
    h = jnp.dot(x_ref[...].astype(jnp.bfloat16),
                w_ref[...].astype(jnp.bfloat16),
                preferred_element_type=jnp.float32)               # (BN, D)

    # (2) Block-diagonal aggregation: ONE (BN,BN)@(BN,D) matmul, f32 operands
    #     (aggregation is not MXU-rate-limited at small N; keeps accuracy).
    g = jnp.dot(a_ref[...], h, preferred_element_type=jnp.float32)  # (BN, D)
    # GCNConv bias intentionally omitted (cancelled by BN mean subtraction).

    # (3) BatchNorm1d (training mode), one-pass stats + folded affine.
    inv_n = 1.0 / BN
    s1 = jnp.sum(g, axis=0, keepdims=True)                        # (1, D)
    s2 = jnp.sum(g * g, axis=0, keepdims=True)                    # (1, D)
    mean = s1 * inv_n
    var = s2 * inv_n - mean * mean                                # biased var
    scale = gamma_ref[...] * jax.lax.rsqrt(var + 1e-5)            # (1, D), EUP
    shift = beta_ref[...] - mean * scale
    y = g * scale + shift                                         # 2 VPU passes

    # (4) LeakyReLU(0.01) + store (unpadded D columns).
    y = jnp.where(y >= 0, y, 0.01 * y)
    o_ref[...] = y.reshape(B, N, D)


# ---------------------------------------------------------------------------
# Glue: block-diagonal GCN-normalized adjacency via one-hot matmuls
# (no XLA scatter-add; runs on the MXU and pipelines with the kernel).
# ---------------------------------------------------------------------------
def build_block_diag_norm_adjacency(edges, weights, num_nodes):
    # edges: [B, 2, E] int32 (row 0 = source, row 1 = target), weights: [B, E]
    # TODO(synk): PyG add_remaining_self_loops preserves existing self-loop
    # weights; here we assume the edge list has no self loops and add
    # unit-weight self loops for every node.
    B, _, E = edges.shape
    BN = B * num_nodes
    offs = (jnp.arange(B, dtype=edges.dtype) * num_nodes)[:, None]
    loop = jnp.arange(num_nodes, dtype=edges.dtype)[None, :]

    src = jnp.concatenate([edges[:, 0, :] + offs, loop + offs], axis=1).reshape(-1)
    dst = jnp.concatenate([edges[:, 1, :] + offs, loop + offs], axis=1).reshape(-1)
    w = jnp.concatenate([weights, jnp.ones((B, num_nodes), weights.dtype)],
                        axis=1).reshape(-1)                        # (Etot,)

    oh_src = jax.nn.one_hot(src, BN, dtype=w.dtype)               # (Etot, BN)
    oh_dst = jax.nn.one_hot(dst, BN, dtype=w.dtype)               # (Etot, BN)

    deg = jnp.einsum("e,en->n", w, oh_dst)                        # weighted in-degree
    dinv = jnp.where(deg > 0, jax.lax.rsqrt(deg), 0.0)            # D^-1/2
    dinv_s = jnp.einsum("en,n->e", oh_src, dinv)
    dinv_d = jnp.einsum("en,n->e", oh_dst, dinv)
    norm = dinv_s * w * dinv_d                                    # per-edge weight

    # A[d, s] = sum_e norm_e * 1[dst_e = d] * 1[src_e = s]
    return jnp.einsum("ed,es->ds", oh_dst * norm[:, None], oh_src)  # (BN, BN)


# ---------------------------------------------------------------------------
# Wrapper
# ---------------------------------------------------------------------------
def graph_layer(x, edges, weights, W, gamma, beta):
    B, N, S = x.shape
    D = W.shape[1]
    BN = B * N

    a_norm = build_block_diag_norm_adjacency(edges, weights, N)   # (BN, BN) f32
    xf = x.reshape(BN, S)                                         # free reshape, f32

    vmem = pl.BlockSpec(memory_space=pltpu.MemorySpace.VMEM)
    flops = 2 * BN * D * S + 2 * BN * BN * D + 6 * BN * D
    bytes_accessed = 4 * (xf.size + a_norm.size + W.size + 2 * D + B * N * D)

    return pl.pallas_call(
        fused_gcn_bn_act_kernel,
        out_shape=jax.ShapeDtypeStruct((B, N, D), jnp.float32),
        in_specs=[vmem] * 5,
        out_specs=vmem,
        compiler_params=pltpu.CompilerParams(
            vmem_limit_bytes=32 * 1024 * 1024),
        cost_estimate=pl.CostEstimate(flops=flops, transcendentals=D,
                                      bytes_accessed=bytes_accessed),
    )(xf, a_norm, W, gamma, beta)


# ---------------------------------------------------------------------------
if __name__ == "__main__":
    B, N, S, D, E = 2, 8, 16, 32, 12   # batch, nodes, sequence_length, output_dim, edges

    key = jax.random.PRNGKey(0)
    kx, ks, ko, kw, kW = jax.random.split(key, 5)

    x = jax.random.normal(kx, (B, N, S), jnp.float32)
    src0 = jax.random.randint(ks, (B, E), 0, N, jnp.int32)
    off = jax.random.randint(ko, (B, E), 1, N, jnp.int32)
    dst0 = (src0 + off) % N                                   # no self loops
    edges = jnp.stack([src0, dst0], axis=1)                   # [B, 2, E]
    weights = jax.random.uniform(kw, (B, E), jnp.float32, 0.1, 1.0)

    # GCNConv linear weight: glorot-uniform (PyG default).  The GCNConv bias
    # (zero-init) is dropped entirely: training-mode BN cancels it exactly.
    limit = (6.0 / (S + D)) ** 0.5
    W = jax.random.uniform(kW, (S, D), jnp.float32, -limit, limit)
    # BatchNorm1d default affine init.  TODO(synk): running_mean/running_var
    # buffer updates (training-mode side effect) are not materialized; forward
    # output uses batch statistics exactly as the module does.
    gamma = jnp.ones((1, D), jnp.float32)
    beta = jnp.zeros((1, D), jnp.float32)

    out = graph_layer(x, edges, weights, W, gamma, beta)
    jax.block_until_ready(out)
    assert out.shape == (B, N, D) and out.dtype == jnp.float32
    assert bool(jnp.all(jnp.isfinite(out)))
    # Sanity: per-feature batch stats of pre-activation are ~(0,1); after
    # LeakyReLU output must be bounded and non-degenerate.
    assert float(jnp.max(jnp.abs(out))) < 50.0
    print("KERNEL_OK")
</pallas_src>

<mosaic_0001>
module attributes {stable_mosaic.version = 11 : i64} {
  func.func @fused_gcn_bn_act_kernel(%arg0: memref<16x16xf32, #tpu.memory_space<vmem>>, %arg1: memref<16x16xf32, #tpu.memory_space<vmem>>, %arg2: memref<16x32xf32, #tpu.memory_space<vmem>>, %arg3: memref<1x32xf32, #tpu.memory_space<vmem>>, %arg4: memref<1x32xf32, #tpu.memory_space<vmem>>, %arg5: memref<2x8x32xf32, #tpu.memory_space<vmem>>) attributes {dimension_semantics = [], scalar_prefetch = 0 : i64, scratch_operands = 0 : i64, tpu.core_type = #tpu.core_type<tc>} {
    %c0 = arith.constant 0 : index
    %c0_0 = arith.constant 0 : index
    %0 = vector.load %arg0[%c0, %c0_0] : memref<16x16xf32, #tpu.memory_space<vmem>>, vector<16x16xf32>
    %1 = arith.truncf %0 : vector<16x16xf32> to vector<16x16xbf16>
    %c0_1 = arith.constant 0 : index
    %c0_2 = arith.constant 0 : index
    %2 = vector.load %arg2[%c0_1, %c0_2] : memref<16x32xf32, #tpu.memory_space<vmem>>, vector<16x32xf32>
    %3 = arith.truncf %2 : vector<16x32xf32> to vector<16x32xbf16>
    %cst = arith.constant dense<0.000000e+00> : vector<16x32xf32>
    %4 = tpu.matmul %1, %3, %cst {dimension_numbers = #tpu.dot_dimension_numbers<[1], [0], [0], [1], [0, 0, 1, 1], [], []>} : vector<16x16xbf16>, vector<16x32xbf16>, vector<16x32xf32> -> vector<16x32xf32>
    %c0_3 = arith.constant 0 : index
    %c0_4 = arith.constant 0 : index
    %5 = vector.load %arg1[%c0_3, %c0_4] : memref<16x16xf32, #tpu.memory_space<vmem>>, vector<16x16xf32>
    %cst_5 = arith.constant dense<0.000000e+00> : vector<16x32xf32>
    %6 = tpu.matmul %5, %4, %cst_5 {dimension_numbers = #tpu.dot_dimension_numbers<[1], [0], [0], [1], [0, 0, 1, 1], [], []>} : vector<16x16xf32>, vector<16x32xf32>, vector<16x32xf32> -> vector<16x32xf32>
    %cst_6 = arith.constant dense<0.000000e+00> : vector<32xf32>
    %7 = vector.multi_reduction <add>, %6, %cst_6 [0] : vector<16x32xf32> to vector<32xf32>
    %8 = vector.shape_cast %7 : vector<32xf32> to vector<1x32xf32>
    %9 = arith.mulf %6, %6 : vector<16x32xf32>
    %cst_7 = arith.constant dense<0.000000e+00> : vector<32xf32>
    %10 = vector.multi_reduction <add>, %9, %cst_7 [0] : vector<16x32xf32> to vector<32xf32>
    %11 = vector.shape_cast %10 : vector<32xf32> to vector<1x32xf32>
    %cst_8 = arith.constant 6.250000e-02 : f32
    %12 = vector.broadcast %cst_8 : f32 to vector<1x32xf32>
    %13 = arith.mulf %8, %12 : vector<1x32xf32>
    %cst_9 = arith.constant 6.250000e-02 : f32
    %14 = vector.broadcast %cst_9 : f32 to vector<1x32xf32>
    %15 = arith.mulf %11, %14 : vector<1x32xf32>
    %16 = arith.mulf %13, %13 : vector<1x32xf32>
    %17 = arith.subf %15, %16 : vector<1x32xf32>
    %c0_10 = arith.constant 0 : index
    %c0_11 = arith.constant 0 : index
    %18 = vector.load %arg3[%c0_10, %c0_11] : memref<1x32xf32, #tpu.memory_space<vmem>>, vector<1x32xf32>
    %cst_12 = arith.constant 9.99999974E-6 : f32
    %19 = vector.broadcast %cst_12 : f32 to vector<1x32xf32>
    %20 = arith.addf %17, %19 : vector<1x32xf32>
    %21 = math.rsqrt %20 : vector<1x32xf32>
    %22 = arith.mulf %18, %21 : vector<1x32xf32>
    %c0_13 = arith.constant 0 : index
    %c0_14 = arith.constant 0 : index
    %23 = vector.load %arg4[%c0_13, %c0_14] : memref<1x32xf32, #tpu.memory_space<vmem>>, vector<1x32xf32>
    %24 = arith.mulf %13, %22 : vector<1x32xf32>
    %25 = arith.subf %23, %24 : vector<1x32xf32>
    %26 = vector.broadcast %22 : vector<1x32xf32> to vector<16x32xf32>
    %27 = arith.mulf %6, %26 : vector<16x32xf32>
    %28 = vector.broadcast %25 : vector<1x32xf32> to vector<16x32xf32>
    %29 = arith.addf %27, %28 : vector<16x32xf32>
    %cst_15 = arith.constant 0.000000e+00 : f32
    %30 = vector.broadcast %cst_15 : f32 to vector<16x32xf32>
    %31 = arith.cmpf oge, %29, %30 : vector<16x32xf32>
    %cst_16 = arith.constant 0.00999999977 : f32
    %32 = vector.broadcast %cst_16 : f32 to vector<16x32xf32>
    %33 = arith.mulf %32, %29 : vector<16x32xf32>
    %34 = arith.select %31, %29, %33 : vector<16x32xi1>, vector<16x32xf32>
    %35 = vector.shape_cast %34 : vector<16x32xf32> to vector<2x8x32xf32>
    %c0_17 = arith.constant 0 : index
    %c0_18 = arith.constant 0 : index
    %c0_19 = arith.constant 0 : index
    %36 = vector.load %arg5[%c0_17, %c0_18, %c0_19] : memref<2x8x32xf32, #tpu.memory_space<vmem>>, vector<2x8x32xf32>
    tpu.vector_store %arg5[%c0_17, %c0_18, %c0_19], %35 {strides = array<i32>} : memref<2x8x32xf32, #tpu.memory_space<vmem>>, vector<2x8x32xf32>,
    return
  }
}

</mosaic_0001>

<llo_original>
// kernel: tpu_custom_call.1
$region0: #{tpu_custom_call.1}
  #allocation0 [shape = 'u32[]', space=smem, size = 0x4, offset = 0x4, fixed_abs, tag = 'smem constant byte address 0x4 - core index']
  #allocation1 [shape = 'u32[72,128]{1,0:T(1,128)}', space=vmem, size = 0x9000, scoped, tag = 'internal scratch']
  %s0 = inlined_call_operand.hbm [shape: f32[16,16], index: 0, kind: input, shape index: {}]
  %s1 = inlined_call_operand.hbm [shape: f32[16,16], index: 1, kind: input, shape index: {}]
  %s2 = inlined_call_operand.hbm [shape: f32[16,32], index: 2, kind: input, shape index: {}]
  %s3 = inlined_call_operand.vmem [shape: f32[1,32], index: 3, kind: input, shape index: {}]
  %s4 = inlined_call_operand.vmem [shape: f32[1,32], index: 4, kind: input, shape index: {}]
  %s5 = inlined_call_operand.hbm [shape: f32[2,8,32], index: 5, kind: output, shape index: {}]
  %s6 = sld [smem:[#allocation0]]
  $region42: #{tpu_custom_call.1} parent=0
    _
  %s8 = ssub.s32 1, %s6
  %s9 = scalar_select 0, %s8, %s6
  $region1: #{tpu_custom_call.1} parent=0
    #allocation2 [shape = 'u8[8192]{0}', space=vmem, size = 0x2000, scoped, tag = 'input window, operand 0, single buffered']
    #allocation3 [shape = 's32[1]{0}', space=sflag, size = 0x4, scoped, tag = 'scoped memory for tpu_custom_call.1']
    #allocation4 [shape = 's32[1]{0}', space=sflag, size = 0x4, scoped, tag = 'scoped memory for tpu_custom_call.1']
    #allocation5 [shape = 'u8[8192]{0}', space=vmem, size = 0x2000, scoped, tag = 'input window, operand 1, single buffered']
    #allocation6 [shape = 's32[1]{0}', space=sflag, size = 0x4, scoped, tag = 'scoped memory for tpu_custom_call.1']
    #allocation7 [shape = 'u8[8192]{0}', space=vmem, size = 0x2000, scoped, tag = 'input window, operand 2, single buffered']
    #allocation8 [shape = 'u8[8192]{0}', space=vmem, size = 0x2000, scoped, tag = 'output window, operand 0, single buffered']
    %10 = vsyncpa [#allocation3], 0
    %11 = vsyncpa [#allocation6], 0
    %12 = vsyncpa [#allocation4], 0
    // Predicated region
    $region2: #{tpu_custom_call.1} parent=1 // pred_check
      _
    $region3: #{tpu_custom_call.1} parent=1 // pred_check_branch
      %14 = sbr.rel (0) target = $region5
    $region4: #{tpu_custom_call.1} parent=1 // pred_region
      %16 = vsyncadd [#allocation3], 0
      %s17 = sshll.u32 %s0, 4
      %s18 = int_to_ptr.hbm [resolvable:$true] %s17
      %s19 = sshll.u32 [#allocation2], 4
      %s20 = int_to_ptr.vmem [resolvable:$true] %s19
      %25 = dma.hbm_to_vmem [thread:$0]  %s18, 256, %s20, [#allocation3], 128, 128, 8
    $region5: #{tpu_custom_call.1} parent=1 // pred_fallthru
      _
    // Predicated region
    $region6: #{tpu_custom_call.1} parent=1 // pred_check
      _
    $region7: #{tpu_custom_call.1} parent=1 // pred_check_branch
      %27 = sbr.rel (0) target = $region9
    $region8: #{tpu_custom_call.1} parent=1 // pred_region
      %29 = vsyncadd [#allocation6], 0
      %s30 = sshll.u32 %s1, 4
      %s31 = int_to_ptr.hbm [resolvable:$true] %s30
      %s32 = sshll.u32 [#allocation5], 4
      %s33 = int_to_ptr.vmem [resolvable:$true] %s32
      %38 = dma.hbm_to_vmem [thread:$0]  %s31, 256, %s33, [#allocation6], 128, 128, 8
    $region9: #{tpu_custom_call.1} parent=1 // pred_fallthru
      _
    // Predicated region
    $region10: #{tpu_custom_call.1} parent=1 // pred_check
      _
    $region11: #{tpu_custom_call.1} parent=1 // pred_check_branch
      %40 = sbr.rel (0) target = $region13
    $region12: #{tpu_custom_call.1} parent=1 // pred_region
      %42 = vsyncadd [#allocation6], 0
      %s43 = sshll.u32 %s2, 4
      %s44 = int_to_ptr.hbm [resolvable:$true] %s43
      %s45 = sshll.u32 [#allocation7], 4
      %s46 = int_to_ptr.vmem [resolvable:$true] %s45
      %51 = dma.hbm_to_vmem [thread:$0]  %s44, 256, %s46, [#allocation6], 128, 128, 8
    $region13: #{tpu_custom_call.1} parent=1 // pred_fallthru
      _
    // Predicated region
    $region14: #{tpu_custom_call.1} parent=1 // pred_check
      _
    $region15: #{tpu_custom_call.1} parent=1 // pred_check_branch
      %53 = sbr.rel (0) target = $region17
    $region16: #{tpu_custom_call.1} parent=1 // pred_region
      _
    $region17: #{tpu_custom_call.1} parent=1 // pred_fallthru
      _
    // Predicated region
    $region18: #{tpu_custom_call.1} parent=1 // pred_check
      _
    $region19: #{tpu_custom_call.1} parent=1 // pred_check_branch
      %55 = sbr.rel (0) target = $region21
    $region20: #{tpu_custom_call.1} parent=1 // pred_region
      _
    $region21: #{tpu_custom_call.1} parent=1 // pred_fallthru
      _
    // Predicated region
    $region22: #{tpu_custom_call.1} parent=1 // pred_check
      _
    $region23: #{tpu_custom_call.1} parent=1 // pred_check_branch
      %57 = sbr.rel (0) target = $region25
    $region24: #{tpu_custom_call.1} parent=1 // pred_region
      %59 = dma.done [#allocation3], 256
    $region25: #{tpu_custom_call.1} parent=1 // pred_fallthru
      _
    // Predicated region
    $region26: #{tpu_custom_call.1} parent=1 // pred_check
      _
    $region27: #{tpu_custom_call.1} parent=1 // pred_check_branch
      %61 = sbr.rel (0) target = $region29
    $region28: #{tpu_custom_call.1} parent=1 // pred_region
      %63 = dma.done [#allocation6], 256
    $region29: #{tpu_custom_call.1} parent=1 // pred_fallthru
      _
    // Predicated region
    $region30: #{tpu_custom_call.1} parent=1 // pred_check
      _
    $region31: #{tpu_custom_call.1} parent=1 // pred_check_branch
      %65 = sbr.rel (0) target = $region33
    $region32: #{tpu_custom_call.1} parent=1 // pred_region
      %67 = dma.done [#allocation6], 256
    $region33: #{tpu_custom_call.1} parent=1 // pred_fallthru
      _
    %v69 = vld [vmem:[#allocation2] sm:$0xff]
    %v70 = vld [vmem:[#allocation2 + $0x8] sm:$0xff]
    %v71 = vpack.c.bf16 %v70, %v69
    %v72 = vld [vmem:[#allocation7] sm:$0xff]
    %v73 = vld [vmem:[#allocation7 + $0x8] sm:$0xff]
    %v74 = vpack.c.bf16 %v73, %v72
    %vm75 = vcmask 130048
    %v77 = vsel %vm75, %v71, 0
    %79 = vmatpush.bf16.msra.mxu0 0
    %80 = vmatpush.bf16.msra.mxu0 0
    %81 = vmatpush.bf16.msra.mxu0 0
    %82 = vmatpush.bf16.msra.mxu0 0
    %83 = vmatpush.bf16.msra.mxu0 0
    %84 = vmatpush.bf16.msra.mxu0 0
    %85 = vmatpush.bf16.msra.mxu0 0
    %86 = vmatpush.bf16.msra.mxu0 %v74
    %87 = vmatmul.bf16.gmra.mxu0 %v77
    %v88 = vpop.f32.mrf.mxu0
    %v89 = vadd.f32 0.0, %v88
    %v90 = vpop.f32.mrf.mxu0
    %v91 = vadd.f32 0.0, %v90
    %92 = vdwg.mxu0
    %v93 = vld [vmem:[#allocation5] sm:$0xff]
    %v94 = vld [vmem:[#allocation5 + $0x8] sm:$0xff]
    %v96 = vsel %vm75, %v93, 0
    %v99 = vsel %vm75, %v94, 0
    %101 = vmatpush.msra.mxu0 0.0
    %102 = vmatpush.msra.mxu0 0.0
    %103 = vmatpush.msra.mxu0 0.0
    %104 = vmatpush.msra.mxu0 0.0
    %105 = vmatpush.msra.mxu0 0.0
    %106 = vmatpush.msra.mxu0 0.0
    %107 = vmatpush.msra.mxu0 0.0
    %108 = vmatpush.msra.mxu0 0.0
    %109 = vmatpush.msra.mxu0 0.0
    %110 = vmatpush.msra.mxu0 0.0
    %111 = vmatpush.msra.mxu0 0.0
    %112 = vmatpush.msra.mxu0 0.0
    %113 = vmatpush.msra.mxu0 0.0
    %114 = vmatpush.msra.mxu0 0.0
    %115 = vmatpush.msra.mxu0 %v91
    %116 = vmatpush.msra.mxu0 %v89
    %117 = vmatmul.f32.gmra.mxu0 %v96
    %v118 = vpop.f32.mrf.mxu0
    %v119 = vadd.f32 0.0, %v118
    %120 = vmatmul.f32.gmra.mxu0 %v99
    %v121 = vpop.f32.mrf.mxu0
    %v122 = vadd.f32 0.0, %v121
    %123 = vdwg.mxu0
    %vm124 = vcmask 261120
    %v125 = vsel %vm124, %v119, 0.0
    %v126 = vsel %vm124, %v122, 0.0
    %v127 = vadd.f32 %v125, %v126
    %v128 = vrot.slane %v127, 4
    %v129 = vadd.f32 %v127, %v128
    %v130 = vrot.slane %v129, 2
    %v131 = vadd.f32 %v129, %v130
    %v132 = vrot.slane %v131, 1
    %v133 = vadd.f32 %v131, %v132
    %v134 = vmul.f32 %v119, %v119
    %v135 = vmul.f32 %v122, %v122
    %v136 = vsel %vm124, %v134, 0.0
    %v137 = vsel %vm124, %v135, 0.0
    %v138 = vadd.f32 %v136, %v137
    %v139 = vrot.slane %v138, 4
    %v140 = vadd.f32 %v138, %v139
    %v141 = vrot.slane %v140, 2
    %v142 = vadd.f32 %v140, %v141
    %v143 = vrot.slane %v142, 1
    %v144 = vadd.f32 %v142, %v143
    %v145 = vmul.f32 %v133, 0.0625
    %v146 = vmul.f32 %v144, 0.0625
    %v147 = vmul.f32 %v145, %v145
    %v148 = vsub.f32 %v146, %v147
    %v149 = vld [vmem:[%s3] sm:$0x1]
    %v150 = vadd.f32 %v148, 1e-05
    %v151 = vrsqrt.pop %v150
    %v152 = vmul.f32 %v151, %v150
    %v153 = vmul.f32 %v152, %v151
    %v154 = vmul.f32 0.5, %v153
    %v155 = vsub.f32 1.5, %v154
    %v156 = vmul.f32 %v151, %v155
    %vm157 = vweird.f32 %v150
    %vm158 = vweird.f32 %v151
    %vm159 = vmor %vm157, %vm158
    %v160 = vsel %vm159, %v151, %v156
    %v161 = vmul.f32 %v149, %v160
    %v162 = vld [vmem:[%s4] sm:$0x1]
    %v163 = vmul.f32 %v145, %v161
    %v164 = vsub.f32 %v162, %v163
    %v166 = vperm.slane %v161, 0
    %v168 = vmul.f32 %v119, %v166
    %v169 = vmul.f32 %v122, %v166
    %v171 = vperm.slane %v164, 0
    %v173 = vadd.f32 %v168, %v171
    %v174 = vadd.f32 %v169, %v171
    %vm175 = vcmp.ge.f32.partialorder %v173, 0.0
    %vm176 = vcmp.ge.f32.partialorder %v174, 0.0
    %v177 = vmul.f32 %v173, 0.01
    %v178 = vmul.f32 %v174, 0.01
    %v179 = vsel %vm175, %v173, %v177
    %v180 = vsel %vm176, %v174, %v178
    %181 = vst.msk [vmem:[#allocation8] sm:$0xff] %vm124, %v179
    %182 = vst.msk [vmem:[#allocation8 + $0x8] sm:$0xff] %vm124, %v180
    // Predicated region
    $region34: #{tpu_custom_call.1} parent=1 // pred_check
      _
    $region35: #{tpu_custom_call.1} parent=1 // pred_check_branch
      %184 = sbr.rel (0) target = $region37
    $region36: #{tpu_custom_call.1} parent=1 // pred_region
      %186 = vsyncadd [#allocation4], 0
      %s187 = sshll.u32 [#allocation8], 4
      %s188 = int_to_ptr.vmem [resolvable:$true] %s187
      %s189 = sshll.u32 %s5, 4
      %s190 = int_to_ptr.hbm [resolvable:$true] %s189
      %195 = dma.vmem_to_hbm [thread:$0]  %s188, 256, %s190, [#allocation4], 128, 128, 8
    $region37: #{tpu_custom_call.1} parent=1 // pred_fallthru
      _
    // Predicated region
    $region38: #{tpu_custom_call.1} parent=1 // pred_check
      _
    $region39: #{tpu_custom_call.1} parent=1 // pred_check_branch
      %197 = sbr.rel (0) target = $region41
    $region40: #{tpu_custom_call.1} parent=1 // pred_region
      %199 = dma.done [#allocation4], 256
    $region41: #{tpu_custom_call.1} parent=1 // pred_fallthru
      _
    %200 = vsyncpa [#allocation3], 1
    %201 = vsyncpa [#allocation6], 1
    %202 = vsyncpa [#allocation4], 1

</llo_original>
